<compile_context>
chip_gen: v5e
topology: v5e:2x2
jax: 0.10.0
libtpu: 0.0.40
codegen_flags: <defaults>
</compile_context>

<pallas_src>
import jax
import jax.numpy as jnp
from jax.experimental import pallas as pl
from jax.experimental.pallas import tpu as pltpu

LN_EPS = 1e-5  # torch.nn.LayerNorm default


def _round_up(x: int, m: int) -> int:
    return (x + m - 1) // m * m


def _round_down(x: int, m: int) -> int:
    return max(m, (x // m) * m)


def residual_kernel(x_ref, w_ref, b_ref, g_ref, beta_ref, o_ref):
    # x_ref: (tm, D)   w_ref: (D, D)   b/g/beta: (1, D)   o_ref: (tm, D)
    xin = x_ref[...]  # native dtype (f32 or bf16)

    # sublayer: Linear(dim, dim).  The weight stays in its wrapper-chosen dtype
    # (f32 for small D, bf16 for large D where the kernel is MXU-bound); the
    # MXU accumulates in f32 via preferred_element_type.
    lhs = xin if xin.dtype == w_ref.dtype else xin.astype(w_ref.dtype)
    h = jnp.dot(lhs, w_ref[...], preferred_element_type=jnp.float32)
    h = h + b_ref[...].astype(jnp.float32)

    # dropout(p=0.1) in eval mode == identity
    # TODO(synk): training-mode dropout would use pltpu.prng_random_bits masking.
    v = xin.astype(jnp.float32) + h

    # LayerNorm over the last dim (biased variance, eps=1e-5, affine), f32 math.
    # Variance via E[v^2] - mean^2 (no `cent` intermediate); gamma/rsqrt are
    # folded into a scale and beta - mean*scale into a shift, so the wide tail
    # is a single multiply-add.
    # TODO(synk): if profiling shows the lane reductions (XLU) binding at small
    # D, move sum(v)/sum(v*v) onto the MXU via a thin ones-matmul.
    mean = jnp.mean(v, axis=-1, keepdims=True)
    msq = jnp.mean(v * v, axis=-1, keepdims=True)
    var = msq - mean * mean
    rstd = jax.lax.rsqrt(var + LN_EPS)
    scale = g_ref[...].astype(jnp.float32) * rstd            # (tm, D)
    shift = beta_ref[...].astype(jnp.float32) - mean * scale  # (tm, D)

    o_ref[...] = (v * scale + shift).astype(o_ref.dtype)


def residual_forward(x, w, b, gamma, beta):
    """x: (B, S, D) -> (B, S, D);  w: (D, D) in (in, out) layout."""
    B, S, D = x.shape
    rows = B * S
    x2 = x.reshape(rows, D)
    b2 = b.reshape(1, D)
    g2 = gamma.reshape(1, D)
    be2 = beta.reshape(1, D)

    # For large D the kernel is MXU-bound; feed the MXU bf16 (weights stored
    # bf16 once here, activations cast in-kernel), accumulate in f32.
    use_bf16_mxu = (D >= 2048) and (jnp.dtype(w.dtype) == jnp.float32)
    w_in = w.astype(jnp.bfloat16) if use_bf16_mxu else w

    act_itemsize = jnp.dtype(x.dtype).itemsize
    w_itemsize = jnp.dtype(w_in.dtype).itemsize
    p_itemsize = jnp.dtype(b.dtype).itemsize

    # Row tile: ~2 MiB per (tm, D) activation tile (HBM-roofline friendly),
    # rounded to 256 rows (full MXU M-granularity on all generations),
    # clamped to [256, 4096].  Shrink only for genuinely small inputs, and
    # then target ~8 grid steps so double-buffering still overlaps (>= 4
    # steps per TensorCore with the parallel axis on v7x megacore).
    target_tile_bytes = 2 << 20
    tm_eff = min(4096, max(256, _round_down(target_tile_bytes // (D * act_itemsize), 256)))
    if rows < 8 * tm_eff:
        tm_eff = max(8, min(tm_eff, _round_up(pl.cdiv(rows, 8), 8)))
    grid = pl.cdiv(rows, tm_eff)

    # VMEM budget: double-buffered activation tiles (in + out), single-buffered
    # resident weight + params (constant index_map, pl.Buffered(1)), plus an
    # estimate for the f32 in-kernel intermediates.
    vmem_request = (
        2 * tm_eff * D * act_itemsize      # x tiles (double-buffered)
        + 2 * tm_eff * D * act_itemsize    # out tiles (double-buffered)
        + D * D * w_itemsize               # weight (single-buffered)
        + 3 * D * p_itemsize               # bias / gamma / beta
        + 4 * tm_eff * D * 4               # f32 intermediates (v, scale/shift, y)
        + (2 << 20)                        # slack
    )
    # Generation-aware cap: leave headroom under physical VMEM for Mosaic
    # internal scratch / spills (v7x: 64 MiB/TC -> ~53 MiB usable; v5e/v6e:
    # 128 MiB -> ~107 MiB usable).
    try:
        vmem_cap = int(pltpu.get_tpu_info().vmem_capacity_bytes)
    except Exception:
        vmem_cap = 64 << 20
    headroom = max(8 << 20, vmem_cap // 6)
    vmem_limit = int(min(max(vmem_request, 32 << 20), vmem_cap - headroom))

    out = pl.pallas_call(
        residual_kernel,
        out_shape=jax.ShapeDtypeStruct((rows, D), x.dtype),
        grid_spec=pltpu.PrefetchScalarGridSpec(
            num_scalar_prefetch=0,
            grid=(grid,),
            in_specs=[
                pl.BlockSpec((tm_eff, D), lambda i: (i, 0)),   # x rows
                pl.BlockSpec((D, D), lambda i: (0, 0),
                             pipeline_mode=pl.Buffered(1)),    # weight (resident)
                pl.BlockSpec((1, D), lambda i: (0, 0),
                             pipeline_mode=pl.Buffered(1)),    # bias
                pl.BlockSpec((1, D), lambda i: (0, 0),
                             pipeline_mode=pl.Buffered(1)),    # ln gamma
                pl.BlockSpec((1, D), lambda i: (0, 0),
                             pipeline_mode=pl.Buffered(1)),    # ln beta
            ],
            out_specs=pl.BlockSpec((tm_eff, D), lambda i: (i, 0)),
        ),
        compiler_params=pltpu.CompilerParams(
            dimension_semantics=("parallel",),
            vmem_limit_bytes=vmem_limit,
        ),
    )(x2, w_in, b2, g2, be2)

    return out.reshape(B, S, D)


def residual_reference(x, w, b, gamma, beta):
    xf = x.astype(jnp.float32)
    h = jnp.einsum("bsd,de->bse", xf, w.astype(jnp.float32)) + b.astype(jnp.float32)
    v = xf + h
    mean = jnp.mean(v, axis=-1, keepdims=True)
    var = jnp.mean((v - mean) ** 2, axis=-1, keepdims=True)
    normed = (v - mean) / jnp.sqrt(var + LN_EPS)
    return normed * gamma.astype(jnp.float32) + beta.astype(jnp.float32)


if __name__ == "__main__":
    # Odd row count (B*S=18) exercises the ragged final block; D=128 sits on
    # one lane tile.
    B, S, D = 2, 9, 128
    key = jax.random.PRNGKey(0)
    kx, kw, kb, kg, kbe = jax.random.split(key, 5)

    x = jax.random.normal(kx, (B, S, D), dtype=jnp.float32)
    # Deterministic parameter init (synthetic, not a checkpoint load).
    w = jax.random.normal(kw, (D, D), dtype=jnp.float32) * (1.0 / jnp.sqrt(D))
    b = jax.random.normal(kb, (D,), dtype=jnp.float32) * 0.01
    # Non-trivial affine params so the LayerNorm scale/shift path is tested.
    gamma = 1.0 + 0.1 * jax.random.normal(kg, (D,), dtype=jnp.float32)
    beta = 0.1 * jax.random.normal(kbe, (D,), dtype=jnp.float32)

    out = jax.block_until_ready(residual_forward(x, w, b, gamma, beta))
    ref = residual_reference(x, w, b, gamma, beta)

    assert out.shape == (B, S, D)
    assert jnp.allclose(out, ref.astype(out.dtype), atol=3e-4, rtol=3e-4)
    print("KERNEL_OK")
</pallas_src>

<mosaic_0001>
module attributes {stable_mosaic.version = 11 : i64} {
  func.func @residual_kernel(%arg0: i32, %arg1: memref<8x128xf32, #tpu.memory_space<vmem>>, %arg2: memref<128x128xf32, #tpu.memory_space<vmem>>, %arg3: memref<1x128xf32, #tpu.memory_space<vmem>>, %arg4: memref<1x128xf32, #tpu.memory_space<vmem>>, %arg5: memref<1x128xf32, #tpu.memory_space<vmem>>, %arg6: memref<8x128xf32, #tpu.memory_space<vmem>>) attributes {dimension_semantics = [#tpu.dimension_semantics<parallel>], iteration_bounds = array<i64: 3>, scalar_prefetch = 0 : i64, scratch_operands = 0 : i64, tpu.core_type = #tpu.core_type<tc>, window_params = [{transform_indices = @transform_0, window_bounds = array<i64: 8, 128>}, {pipeline_mode = #tpu.pipeline_mode<synchronous>, transform_indices = @transform_1, window_bounds = array<i64: 128, 128>}, {pipeline_mode = #tpu.pipeline_mode<synchronous>, transform_indices = @transform_2, window_bounds = array<i64: 1, 128>}, {pipeline_mode = #tpu.pipeline_mode<synchronous>, transform_indices = @transform_3, window_bounds = array<i64: 1, 128>}, {pipeline_mode = #tpu.pipeline_mode<synchronous>, transform_indices = @transform_4, window_bounds = array<i64: 1, 128>}, {transform_indices = @transform_5, window_bounds = array<i64: 8, 128>}]} {
    %c0 = arith.constant 0 : index
    %c0_0 = arith.constant 0 : index
    %0 = vector.load %arg1[%c0, %c0_0] : memref<8x128xf32, #tpu.memory_space<vmem>>, vector<8x128xf32>
    %c0_1 = arith.constant 0 : index
    %c0_2 = arith.constant 0 : index
    %1 = vector.load %arg2[%c0_1, %c0_2] : memref<128x128xf32, #tpu.memory_space<vmem>>, vector<128x128xf32>
    %cst = arith.constant dense<0.000000e+00> : vector<8x128xf32>
    %2 = tpu.matmul %0, %1, %cst {dimension_numbers = #tpu.dot_dimension_numbers<[1], [0], [0], [1], [0, 0, 1, 1], [], []>} : vector<8x128xf32>, vector<128x128xf32>, vector<8x128xf32> -> vector<8x128xf32>
    %c0_3 = arith.constant 0 : index
    %c0_4 = arith.constant 0 : index
    %3 = vector.load %arg3[%c0_3, %c0_4] : memref<1x128xf32, #tpu.memory_space<vmem>>, vector<1x128xf32>
    %4 = vector.broadcast %3 : vector<1x128xf32> to vector<8x128xf32>
    %5 = arith.addf %2, %4 : vector<8x128xf32>
    %6 = arith.addf %0, %5 : vector<8x128xf32>
    %cst_5 = arith.constant dense<0.000000e+00> : vector<8xf32>
    %7 = vector.multi_reduction <add>, %6, %cst_5 [1] : vector<8x128xf32> to vector<8xf32>
    %8 = vector.shape_cast %7 : vector<8xf32> to vector<8x1xf32>
    %cst_6 = arith.constant 1.280000e+02 : f32
    %9 = vector.broadcast %cst_6 : f32 to vector<8x1xf32>
    %10 = arith.divf %8, %9 : vector<8x1xf32>
    %11 = arith.mulf %6, %6 : vector<8x128xf32>
    %cst_7 = arith.constant dense<0.000000e+00> : vector<8xf32>
    %12 = vector.multi_reduction <add>, %11, %cst_7 [1] : vector<8x128xf32> to vector<8xf32>
    %13 = vector.shape_cast %12 : vector<8xf32> to vector<8x1xf32>
    %cst_8 = arith.constant 1.280000e+02 : f32
    %14 = vector.broadcast %cst_8 : f32 to vector<8x1xf32>
    %15 = arith.divf %13, %14 : vector<8x1xf32>
    %16 = arith.mulf %10, %10 : vector<8x1xf32>
    %17 = arith.subf %15, %16 : vector<8x1xf32>
    %cst_9 = arith.constant 9.99999974E-6 : f32
    %18 = vector.broadcast %cst_9 : f32 to vector<8x1xf32>
    %19 = arith.addf %17, %18 : vector<8x1xf32>
    %20 = math.rsqrt %19 : vector<8x1xf32>
    %c0_10 = arith.constant 0 : index
    %c0_11 = arith.constant 0 : index
    %21 = vector.load %arg4[%c0_10, %c0_11] : memref<1x128xf32, #tpu.memory_space<vmem>>, vector<1x128xf32>
    %22 = vector.broadcast %21 : vector<1x128xf32> to vector<8x128xf32>
    %23 = vector.broadcast %20 : vector<8x1xf32> to vector<8x128xf32>
    %24 = arith.mulf %22, %23 : vector<8x128xf32>
    %c0_12 = arith.constant 0 : index
    %c0_13 = arith.constant 0 : index
    %25 = vector.load %arg5[%c0_12, %c0_13] : memref<1x128xf32, #tpu.memory_space<vmem>>, vector<1x128xf32>
    %26 = vector.broadcast %10 : vector<8x1xf32> to vector<8x128xf32>
    %27 = arith.mulf %26, %24 : vector<8x128xf32>
    %28 = vector.broadcast %25 : vector<1x128xf32> to vector<8x128xf32>
    %29 = arith.subf %28, %27 : vector<8x128xf32>
    %30 = arith.mulf %6, %24 : vector<8x128xf32>
    %31 = arith.addf %30, %29 : vector<8x128xf32>
    %c0_14 = arith.constant 0 : index
    %c0_15 = arith.constant 0 : index
    %32 = vector.load %arg6[%c0_14, %c0_15] : memref<8x128xf32, #tpu.memory_space<vmem>>, vector<8x128xf32>
    tpu.vector_store %arg6[%c0_14, %c0_15], %31 {strides = array<i32>} : memref<8x128xf32, #tpu.memory_space<vmem>>, vector<8x128xf32>,
    return
  }
  func.func @transform_0(%arg0: i32) -> (i32, i32) {
    %c0_i32 = arith.constant 0 : i32
    %c0_i32_0 = arith.constant 0 : i32
    return %arg0, %c0_i32 : i32, i32
  }
  func.func @transform_1(%arg0: i32) -> (i32, i32) {
    %c0_i32 = arith.constant 0 : i32
    %c0_i32_0 = arith.constant 0 : i32
    %c0_i32_1 = arith.constant 0 : i32
    return %c0_i32, %c0_i32_0 : i32, i32
  }
  func.func @transform_2(%arg0: i32) -> (i32, i32) {
    %c0_i32 = arith.constant 0 : i32
    %c0_i32_0 = arith.constant 0 : i32
    %c0_i32_1 = arith.constant 0 : i32
    return %c0_i32, %c0_i32_0 : i32, i32
  }
  func.func @transform_3(%arg0: i32) -> (i32, i32) {
    %c0_i32 = arith.constant 0 : i32
    %c0_i32_0 = arith.constant 0 : i32
    %c0_i32_1 = arith.constant 0 : i32
    return %c0_i32, %c0_i32_0 : i32, i32
  }
  func.func @transform_4(%arg0: i32) -> (i32, i32) {
    %c0_i32 = arith.constant 0 : i32
    %c0_i32_0 = arith.constant 0 : i32
    %c0_i32_1 = arith.constant 0 : i32
    return %c0_i32, %c0_i32_0 : i32, i32
  }
  func.func @transform_5(%arg0: i32) -> (i32, i32) {
    %c0_i32 = arith.constant 0 : i32
    %c0_i32_0 = arith.constant 0 : i32
    return %arg0, %c0_i32 : i32, i32
  }
}

</mosaic_0001>

<llo_original>
// kernel: tpu_custom_call.1
$region0: #{tpu_custom_call.1}
  #allocation0 [shape = 'u32[]', space=smem, size = 0x4, offset = 0x4, fixed_abs, tag = 'smem constant byte address 0x4 - core index']
  #allocation1 [shape = 'u32[72,128]{1,0:T(1,128)}', space=vmem, size = 0x9000, scoped, tag = 'internal scratch']
  %s0 = inlined_call_operand.hbm [shape: f32[18,128], index: 0, kind: input, shape index: {}]
  %s1 = inlined_call_operand.hbm [shape: f32[128,128], index: 1, kind: input, shape index: {}]
  %s2 = inlined_call_operand.vmem [shape: f32[1,128], index: 2, kind: input, shape index: {}]
  %s3 = inlined_call_operand.vmem [shape: f32[1,128], index: 3, kind: input, shape index: {}]
  %s4 = inlined_call_operand.vmem [shape: f32[1,128], index: 4, kind: input, shape index: {}]
  %s5 = inlined_call_operand.hbm [shape: f32[18,128], index: 5, kind: output, shape index: {}]
  %s6 = sld [smem:[#allocation0]]
  $region61: #{tpu_custom_call.1} parent=0
    _
  %s8 = ssub.s32 1, %s6
  %s9 = scalar_select 0, %s8, %s6
  $region1: #{tpu_custom_call.1} parent=0
    #allocation2 [shape = 'u8[8192]{0}', space=vmem, size = 0x2000, scoped, tag = 'input window, operand 0']
    #allocation3 [shape = 's32[2]{0}', space=sflag, size = 0x8, scoped, tag = 'scoped memory for tpu_custom_call.1']
    #allocation4 [shape = 's32[2]{0}', space=sflag, size = 0x8, scoped, tag = 'scoped memory for tpu_custom_call.1']
    #allocation5 [shape = 'u8[65536]{0}', space=vmem, size = 0x10000, scoped, tag = 'input window, operand 1, single buffered']
    #allocation6 [shape = 's32[1]{0}', space=sflag, size = 0x4, scoped, tag = 'scoped memory for tpu_custom_call.1']
    #allocation7 [shape = 'u8[8192]{0}', space=vmem, size = 0x2000, scoped, tag = 'output window, operand 0']
    %10 = vsyncpa [#allocation3], 0
    %s11 = scalar_lea.sflag [#allocation3], 1
    %12 = vsyncpa %s11, 0
    %13 = vsyncpa [#allocation6], 0
    %14 = vsyncpa [#allocation4], 0
    %s15 = scalar_lea.sflag [#allocation4], 1
    %16 = vsyncpa %s15, 0
    loop: start=0, step=1, limit=5
    $region2: #{tpu_custom_call.1} parent=1 // loop_pre_header
      _
    $region3: #{tpu_custom_call.1} parent=1 // loop_header
      %s18 = sphi 0, %s22
      %p19 = scmp.ge.s32.totalorder %s18, 5
      %s28 = sphi 0, %s30
      %s31 = sphi 0, %s28
      %s32 = sphi 0, %s31
      %s48 = sphi 0, %s32
      %s52 = sphi 0, %s52
      %s54 = sphi 0, %s52
      %s55 = sphi 0, %s54
      %s69 = sphi 0, %s55
      %s73 = sphi 0, %s73
      %s75 = sphi 0, %s73
      %s76 = sphi 0, %s75
      %s90 = sphi 0, %s76
      %s94 = sphi 0, %s94
      %s96 = sphi 0, %s94
      %s97 = sphi 0, %s96
      %s111 = sphi 0, %s97
      %s115 = sphi 0, %s115
      %s117 = sphi 0, %s115
      %s118 = sphi 0, %s117
      %s132 = sphi 0, %s118
      %s138 = sphi 0, %s140
      %s141 = sphi 0, %s138
      %s142 = sphi 0, %s141
      %s158 = sphi 0, %s142
    $region4: #{tpu_custom_call.1} parent=1 // loop_header_branch
      %21 = sbr.rel (%p19) target = $region8
    $region5: #{tpu_custom_call.1} parent=1 // loop_body
      %s23 = ssub.s32 %s18, 1
      %s24 = ssub.s32 %s18, 2
      %s25 = sadd.s32 %s18, 1
      %s26 = ssub.s32 %s18, %s25
      %p27 = scmp.eq.s32.totalorder %s26, 0
      %s29 = sadd.s32 %s28, 1
      %s30 = scalar_select %p27, %s28, %s29
      %p33 = pneg %p27
      %p34 = scmp.eq.s32.totalorder %s18, 2
      %p35 = por %p33, %p34
      %p36 = scmp.ne.s32.totalorder %s28, %s31
      %p37 = scmp.eq.s32.totalorder %s18, 0
      %p38 = por %p36, %p37
      %p39 = scmp.ne.s32.totalorder %s28, %s31
      %p40 = scmp.eq.s32.totalorder %s23, 2
      %p41 = por %p39, %p40
      %p42 = scmp.ne.s32.totalorder %s31, %s32
      %p43 = scmp.eq.s32.totalorder %s23, 0
      %p44 = por %p42, %p43
      %p45 = scmp.ne.s32.totalorder %s31, %s32
      %p46 = scmp.eq.s32.totalorder %s24, 2
      %p47 = por %p45, %p46
      %p49 = scmp.ne.s32.totalorder %s32, %s48
      %p50 = scmp.eq.s32.totalorder %s24, 0
      %p51 = por %p49, %p50
      %s53 = sadd.s32 %s52, 1
      %p56 = scmp.eq.s32.totalorder %s18, 2
      %p57 = scmp.ne.s32.totalorder %s52, %s54
      %p58 = scmp.eq.s32.totalorder %s18, 0
      %p59 = por %p57, %p58
      %p60 = scmp.ne.s32.totalorder %s52, %s54
      %p61 = scmp.eq.s32.totalorder %s23, 2
      %p62 = por %p60, %p61
      %p63 = scmp.ne.s32.totalorder %s54, %s55
      %p64 = scmp.eq.s32.totalorder %s23, 0
      %p65 = por %p63, %p64
      %p66 = scmp.ne.s32.totalorder %s54, %s55
      %p67 = scmp.eq.s32.totalorder %s24, 2
      %p68 = por %p66, %p67
      %p70 = scmp.ne.s32.totalorder %s55, %s69
      %p71 = scmp.eq.s32.totalorder %s24, 0
      %p72 = por %p70, %p71
      %s74 = sadd.s32 %s73, 1
      %p77 = scmp.eq.s32.totalorder %s18, 2
      %p78 = scmp.ne.s32.totalorder %s73, %s75
      %p79 = scmp.eq.s32.totalorder %s18, 0
      %p80 = por %p78, %p79
      %p81 = scmp.ne.s32.totalorder %s73, %s75
      %p82 = scmp.eq.s32.totalorder %s23, 2
      %p83 = por %p81, %p82
      %p84 = scmp.ne.s32.totalorder %s75, %s76
      %p85 = scmp.eq.s32.totalorder %s23, 0
      %p86 = por %p84, %p85
      %p87 = scmp.ne.s32.totalorder %s75, %s76
      %p88 = scmp.eq.s32.totalorder %s24, 2
      %p89 = por %p87, %p88
      %p91 = scmp.ne.s32.totalorder %s76, %s90
      %p92 = scmp.eq.s32.totalorder %s24, 0
      %p93 = por %p91, %p92
      %s95 = sadd.s32 %s94, 1
      %p98 = scmp.eq.s32.totalorder %s18, 2
      %p99 = scmp.ne.s32.totalorder %s94, %s96
      %p100 = scmp.eq.s32.totalorder %s18, 0
      %p101 = por %p99, %p100
      %p102 = scmp.ne.s32.totalorder %s94, %s96
      %p103 = scmp.eq.s32.totalorder %s23, 2
      %p104 = por %p102, %p103
      %p105 = scmp.ne.s32.totalorder %s96, %s97
      %p106 = scmp.eq.s32.totalorder %s23, 0
      %p107 = por %p105, %p106
      %p108 = scmp.ne.s32.totalorder %s96, %s97
      %p109 = scmp.eq.s32.totalorder %s24, 2
      %p110 = por %p108, %p109
      %p112 = scmp.ne.s32.totalorder %s97, %s111
      %p113 = scmp.eq.s32.totalorder %s24, 0
      %p114 = por %p112, %p113
      %s116 = sadd.s32 %s115, 1
      %p119 = scmp.eq.s32.totalorder %s18, 2
      %p120 = scmp.ne.s32.totalorder %s115, %s117
      %p121 = scmp.eq.s32.totalorder %s18, 0
      %p122 = por %p120, %p121
      %p123 = scmp.ne.s32.totalorder %s115, %s117
      %p124 = scmp.eq.s32.totalorder %s23, 2
      %p125 = por %p123, %p124
      %p126 = scmp.ne.s32.totalorder %s117, %s118
      %p127 = scmp.eq.s32.totalorder %s23, 0
      %p128 = por %p126, %p127
      %p129 = scmp.ne.s32.totalorder %s117, %s118
      %p130 = scmp.eq.s32.totalorder %s24, 2
      %p131 = por %p129, %p130
      %p133 = scmp.ne.s32.totalorder %s118, %s132
      %p134 = scmp.eq.s32.totalorder %s24, 0
      %p135 = por %p133, %p134
      %s136 = ssub.s32 %s18, %s25
      %p137 = scmp.eq.s32.totalorder %s136, 0
      %s139 = sadd.s32 %s138, 1
      %s140 = scalar_select %p137, %s138, %s139
      %p143 = pneg %p137
      %p144 = scmp.eq.s32.totalorder %s18, 2
      %p145 = por %p143, %p144
      %p146 = scmp.ne.s32.totalorder %s138, %s141
      %p147 = scmp.eq.s32.totalorder %s18, 0
      %p148 = por %p146, %p147
      %p149 = scmp.ne.s32.totalorder %s138, %s141
      %p150 = scmp.eq.s32.totalorder %s23, 2
      %p151 = por %p149, %p150
      %p152 = scmp.ne.s32.totalorder %s141, %s142
      %p153 = scmp.eq.s32.totalorder %s23, 0
      %p154 = por %p152, %p153
      %p155 = scmp.ne.s32.totalorder %s141, %s142
      %p156 = scmp.eq.s32.totalorder %s24, 2
      %p157 = por %p155, %p156
      %p159 = scmp.ne.s32.totalorder %s142, %s158
      %p160 = scmp.eq.s32.totalorder %s24, 0
      %p161 = por %p159, %p160
      %p162 = scmp.le.s32.totalorder 1, %s18
      %p163 = scmp.lt.s32.totalorder %s18, 4
      %p164 = pnand %p162, %p163
      %p165 = pneg %p164
      // Predicated region
      $region9: #{tpu_custom_call.1} parent=5 // pred_check
        _
      $region10: #{tpu_custom_call.1} parent=5 // pred_check_branch
        %167 = sbr.rel (%p164) target = $region12
      $region11: #{tpu_custom_call.1} parent=5 // pred_region
        %s168 = ssub.s32 %s18, 1
        // Predicated region
        $region13: #{tpu_custom_call.1} parent=11 // pred_check
          %p169 = pneg %p65
        $region14: #{tpu_custom_call.1} parent=11 // pred_check_branch
          %171 = sbr.rel (%p169) target = $region16
        $region15: #{tpu_custom_call.1} parent=11 // pred_region
          %173 = vsyncadd [#allocation6], 0
          %s174 = sshll.u32 %s1, 4
          %s175 = int_to_ptr.hbm [resolvable:$true] %s174
          %s176 = sshll.u32 [#allocation5], 4
          %s177 = int_to_ptr.vmem [resolvable:$true] %s176
          %182 = dma.hbm_to_vmem [thread:$0]  %s175, 2048, %s177, [#allocation6], 128, 128, 8
        $region16: #{tpu_custom_call.1} parent=11 // pred_fallthru
          _
        // Predicated region
        $region17: #{tpu_custom_call.1} parent=11 // pred_check
          %p183 = pneg %p86
        $region18: #{tpu_custom_call.1} parent=11 // pred_check_branch
          %185 = sbr.rel (%p183) target = $region20
        $region19: #{tpu_custom_call.1} parent=11 // pred_region
          _
        $region20: #{tpu_custom_call.1} parent=11 // pred_fallthru
          _
        // Predicated region
        $region21: #{tpu_custom_call.1} parent=11 // pred_check
          %p186 = pneg %p107
        $region22: #{tpu_custom_call.1} parent=11 // pred_check_branch
          %188 = sbr.rel (%p186) target = $region24
        $region23: #{tpu_custom_call.1} parent=11 // pred_region
          _
        $region24: #{tpu_custom_call.1} parent=11 // pred_fallthru
          _
        // Predicated region
        $region25: #{tpu_custom_call.1} parent=11 // pred_check
          %p189 = pneg %p128
        $region26: #{tpu_custom_call.1} parent=11 // pred_check_branch
          %191 = sbr.rel (%p189) target = $region28
        $region27: #{tpu_custom_call.1} parent=11 // pred_region
          _
        $region28: #{tpu_custom_call.1} parent=11 // pred_fallthru
          _
      $region12: #{tpu_custom_call.1} parent=5 // pred_fallthru
        _
      %p192 = scmp.lt.s32.totalorder %s18, 3
      // Predicated region
      $region29: #{tpu_custom_call.1} parent=5 // pred_check
        %p193 = pneg %p192
      $region30: #{tpu_custom_call.1} parent=5 // pred_check_branch
        %195 = sbr.rel (%p193) target = $region32
      $region31: #{tpu_custom_call.1} parent=5 // pred_region
        // Predicated region
        $region33: #{tpu_custom_call.1} parent=31 // pred_check
          %p196 = pneg %p38
        $region34: #{tpu_custom_call.1} parent=31 // pred_check_branch
          %198 = sbr.rel (%p196) target = $region36
        $region35: #{tpu_custom_call.1} parent=31 // pred_region
          %s199 = sand.u32 %s28, 1
          %s200 = scalar_lea.sflag [#allocation3], %s199
          %s201 = sand.u32 %s28, 1
          %s202 = smul.addr %s201, 8
          %s203 = scalar_lea.vmem [#allocation2], %s202
          %205 = vsyncadd %s200, 0
          %s206 = smul.addr %s18, 8
          %s207 = scalar_lea.hbm %s0, %s206
          %s209 = sshll.u32 %s207, 4
          %s210 = int_to_ptr.hbm [resolvable:$true] %s209
          %s211 = sshll.u32 %s203, 4
          %s212 = int_to_ptr.vmem [resolvable:$true] %s211
          %214 = dma.hbm_to_vmem [thread:$0]  %s210, 128, %s212, %s200
        $region36: #{tpu_custom_call.1} parent=31 // pred_fallthru
          _
      $region32: #{tpu_custom_call.1} parent=5 // pred_fallthru
        _
      %p215 = scmp.le.s32.totalorder 1, %s18
      %p216 = scmp.lt.s32.totalorder %s18, 4
      %p217 = pnand %p215, %p216
      %p218 = pneg %p217
      // Predicated region
      $region37: #{tpu_custom_call.1} parent=5 // pred_check
        _
      $region38: #{tpu_custom_call.1} parent=5 // pred_check_branch
        %220 = sbr.rel (%p217) target = $region40
      $region39: #{tpu_custom_call.1} parent=5 // pred_region
        %s221 = ssub.s32 %s18, 1
        %s222 = sand.u32 %s31, 1
        %s223 = scalar_lea.sflag [#allocation3], %s222
        %s224 = sand.u32 %s31, 1
        %s225 = smul.addr %s224, 8
        %s226 = scalar_lea.vmem [#allocation2], %s225
        // Predicated region
        $region41: #{tpu_custom_call.1} parent=39 // pred_check
          %p227 = pneg %p44
        $region42: #{tpu_custom_call.1} parent=39 // pred_check_branch
          %229 = sbr.rel (%p227) target = $region44
        $region43: #{tpu_custom_call.1} parent=39 // pred_region
          %231 = dma.done %s223, 128
        $region44: #{tpu_custom_call.1} parent=39 // pred_fallthru
          _
        // Predicated region
        $region45: #{tpu_custom_call.1} parent=39 // pred_check
          %p232 = pneg %p65
        $region46: #{tpu_custom_call.1} parent=39 // pred_check_branch
          %234 = sbr.rel (%p232) target = $region48
        $region47: #{tpu_custom_call.1} parent=39 // pred_region
          %236 = dma.done [#allocation6], 2048
        $region48: #{tpu_custom_call.1} parent=39 // pred_fallthru
          _
        %s237 = sand.u32 %s31, 1
        %s238 = scalar_lea.sflag [#allocation3], %s237
        %s239 = sand.u32 %s31, 1
        %s240 = smul.addr %s239, 8
        %s241 = scalar_lea.vmem [#allocation2], %s240
        %p242 = pneg %p44
        %p243 = pneg %p41
        %p244 = pneg %p65
        %p245 = pneg %p62
        %p246 = pneg %p86
        %p247 = pneg %p83
        %p248 = pneg %p107
        %p249 = pneg %p104
        %p250 = pneg %p128
        %p251 = pneg %p125
        %p252 = pneg %p154
        %p253 = pneg %p151
        %s254 = sand.u32 %s141, 1
        %s255 = scalar_lea.sflag [#allocation4], %s254
        %s256 = sand.u32 %s141, 1
        %s257 = smul.addr %s256, 8
        %s258 = scalar_lea.vmem [#allocation7], %s257
        %v259 = vld [vmem:[%s226] sm:$0xff]
        %v260 = vld [vmem:[#allocation5] sm:$0xff]
        %v261 = vld [vmem:[#allocation5 + $0x8] sm:$0xff]
        %v262 = vld [vmem:[#allocation5 + $0x10] sm:$0xff]
        %v263 = vld [vmem:[#allocation5 + $0x18] sm:$0xff]
        %v264 = vld [vmem:[#allocation5 + $0x20] sm:$0xff]
        %v265 = vld [vmem:[#allocation5 + $0x28] sm:$0xff]
        %v266 = vld [vmem:[#allocation5 + $0x30] sm:$0xff]
        %v267 = vld [vmem:[#allocation5 + $0x38] sm:$0xff]
        %v268 = vld [vmem:[#allocation5 + $0x40] sm:$0xff]
        %v269 = vld [vmem:[#allocation5 + $0x48] sm:$0xff]
        %v270 = vld [vmem:[#allocation5 + $0x50] sm:$0xff]
        %v271 = vld [vmem:[#allocation5 + $0x58] sm:$0xff]
        %v272 = vld [vmem:[#allocation5 + $0x60] sm:$0xff]
        %v273 = vld [vmem:[#allocation5 + $0x68] sm:$0xff]
        %v274 = vld [vmem:[#allocation5 + $0x70] sm:$0xff]
        %v275 = vld [vmem:[#allocation5 + $0x78] sm:$0xff]
        %v276 = vld [vmem:[%s2] sm:$0x1]
        %v278 = vperm.slane %v276, 0
        %280 = vmatpush.msra.mxu0 %v275
        %281 = vmatpush.msra.mxu0 %v274
        %282 = vmatpush.msra.mxu0 %v273
        %283 = vmatpush.msra.mxu0 %v272
        %284 = vmatpush.msra.mxu0 %v271
        %285 = vmatpush.msra.mxu0 %v270
        %286 = vmatpush.msra.mxu0 %v269
        %287 = vmatpush.msra.mxu0 %v268
        %288 = vmatpush.msra.mxu0 %v267
        %289 = vmatpush.msra.mxu0 %v266
        %290 = vmatpush.msra.mxu0 %v265
        %291 = vmatpush.msra.mxu0 %v264
        %292 = vmatpush.msra.mxu0 %v263
        %293 = vmatpush.msra.mxu0 %v262
        %294 = vmatpush.msra.mxu0 %v261
        %295 = vmatpush.msra.mxu0 %v260
        %296 = vmatmul.f32.gmra.mxu0 %v259
        %v297 = vpop.f32.mrf.mxu0
        %v298 = vadd.f32 %v278, %v297
        %299 = vdwg.mxu0
        %v300 = vadd.f32 %v259, %v298
        %301 = vadd.xlane.f32.xlu0 %v300
        %v302 = vpop.xlane.xlu0 %301
        %v303 = vrcp.pop 128.0
        %v304 = vmul.f32 128.0, %v303
        %v305 = vsub.f32 1.0, %v304
        %v306 = vmul.f32 %v303, %v305
        %v307 = vadd.f32 %v303, %v306
        %vm308 = vweird.f32 %v303
        %v309 = vsel %vm308, %v303, %v307
        %v310 = vmul.f32 %v302, %v309
        %v311 = vmul.f32 %v300, %v300
        %312 = vadd.xlane.f32.xlu0 %v311
        %v313 = vpop.xlane.xlu0 %312
        %v314 = vmul.f32 %v313, %v309
        %v315 = vmul.f32 %v310, %v310
        %v316 = vsub.f32 %v314, %v315
        %v317 = vadd.f32 %v316, 1e-05
        %v318 = vrsqrt.pop %v317
        %v319 = vmul.f32 %v318, %v317
        %v320 = vmul.f32 %v319, %v318
        %v321 = vmul.f32 0.5, %v320
        %v322 = vsub.f32 1.5, %v321
        %v323 = vmul.f32 %v318, %v322
        %vm324 = vweird.f32 %v317
        %vm325 = vweird.f32 %v318
        %vm326 = vmor %vm324, %vm325
        %v327 = vsel %vm326, %v318, %v323
        %v328 = vld [vmem:[%s3] sm:$0x1]
        %v330 = vperm.slane %v328, 0
        %v332 = vmul.f32 %v330, %v327
        %v333 = vld [vmem:[%s4] sm:$0x1]
        %v334 = vmul.f32 %v310, %v332
        %v336 = vperm.slane %v333, 0
        %v338 = vsub.f32 %v336, %v334
        %v339 = vmul.f32 %v300, %v332
        %v340 = vadd.f32 %v339, %v338
        %341 = vst [vmem:[%s258] sm:$0xff] %v340
        %s342 = sand.u32 %s141, 1
        %s343 = scalar_lea.sflag [#allocation4], %s342
        %s344 = sand.u32 %s141, 1
        %s345 = smul.addr %s344, 8
        %s346 = scalar_lea.vmem [#allocation7], %s345
        // Predicated region
        $region49: #{tpu_custom_call.1} parent=39 // pred_check
          %p347 = pneg %p151
        $region50: #{tpu_custom_call.1} parent=39 // pred_check_branch
          %349 = sbr.rel (%p347) target = $region52
        $region51: #{tpu_custom_call.1} parent=39 // pred_region
          %351 = vsyncadd %s343, 0
          %s352 = smul.addr %s23, 8
          %s353 = scalar_lea.hbm %s5, %s352
          %s355 = sshll.u32 %s346, 4
          %s356 = int_to_ptr.vmem [resolvable:$true] %s355
          %s357 = sshll.u32 %s353, 4
          %s358 = int_to_ptr.hbm [resolvable:$true] %s357
          %360 = dma.vmem_to_hbm [thread:$0]  %s356, 128, %s358, %s343
        $region52: #{tpu_custom_call.1} parent=39 // pred_fallthru
          _
      $region40: #{tpu_custom_call.1} parent=5 // pred_fallthru
        _
      %p361 = scmp.le.s32.totalorder 2, %s18
      // Predicated region
      $region53: #{tpu_custom_call.1} parent=5 // pred_check
        %p362 = pneg %p361
      $region54: #{tpu_custom_call.1} parent=5 // pred_check_branch
        %364 = sbr.rel (%p362) target = $region56
      $region55: #{tpu_custom_call.1} parent=5 // pred_region
        %s365 = ssub.s32 %s18, 2
        // Predicated region
        $region57: #{tpu_custom_call.1} parent=55 // pred_check
          %p366 = pneg %p157
        $region58: #{tpu_custom_call.1} parent=55 // pred_check_branch
          %368 = sbr.rel (%p366) target = $region60
        $region59: #{tpu_custom_call.1} parent=55 // pred_region
          %s369 = sand.u32 %s142, 1
          %s370 = scalar_lea.sflag [#allocation4], %s369
          %s371 = sand.u32 %s142, 1
          %s372 = smul.addr %s371, 8
          %s373 = scalar_lea.vmem [#allocation7], %s372
          %375 = dma.done %s370, 128
        $region60: #{tpu_custom_call.1} parent=55 // pred_fallthru
          _
      $region56: #{tpu_custom_call.1} parent=5 // pred_fallthru
        _
    $region6: #{tpu_custom_call.1} parent=1 // loop_footer
      %s22 = sadd.s32 1, %s18
    $region7: #{tpu_custom_call.1} parent=1 // loop_footer_branch
      %17 = sbr.rel target = $region3
    $region8: #{tpu_custom_call.1} parent=1 // loop_exit
      _
    %376 = vsyncpa [#allocation3], 1
    %s377 = scalar_lea.sflag [#allocation3], 1
    %378 = vsyncpa %s377, 1
    %379 = vsyncpa [#allocation6], 1
    %380 = vsyncpa [#allocation4], 1
    %s381 = scalar_lea.sflag [#allocation4], 1
    %382 = vsyncpa %s381, 1

</llo_original>
